<compile_context>
chip_gen: v5e
topology: v5e:2x2
jax: 0.10.0
libtpu: 0.0.40
codegen_flags: <defaults>
</compile_context>

<pallas_src>
import jax
import jax.numpy as jnp
from jax.experimental import pallas as pl
from jax.experimental.pallas import tpu as pltpu

# ---------------- configuration (small synthetic sizes) ----------------
VOCAB       = 64
SEQ         = 8
BATCH       = 2
HIDDEN_SIZE = 32            # base_model.config.hidden_size
HIDDEN_DIM  = 32            # mlp hidden_dim
NUM_POSES   = 8             # trajectory_sampling.num_poses
OUT_DIM     = NUM_POSES * 3
LORA_R      = 8
LORA_ALPHA  = 32
LORA_SCALE  = float(LORA_ALPHA) / float(LORA_R)


# ---------------- Pallas kernel: whole batch in one grid step ----------------
def lora_mlp_kernel(ids_ref, wf_ref, w2_ref, w3_ref, b1_ref, b2_ref, b3_ref,
                    out_ref):
    B, S = BATCH, SEQ

    # ---- fused embedding gather + mean-pool + (merged LoRA proj) + first MLP
    # layer.  Everything up to the first ReLU is linear, so it was pre-folded
    # offline into W_fused = emb @ (wq + scale*A@B) @ w1  (VOCAB, HIDDEN_DIM).
    # Here we only need the per-batch mean token distribution.
    ids = jnp.clip(ids_ref[...], 0, VOCAB - 1)                     # (B, S, 1) int32
    vocab_iota = jax.lax.broadcasted_iota(jnp.int32, (B, S, VOCAB), 2)
    onehot = (ids == vocab_iota).astype(jnp.float32)               # (B, S, VOCAB)
    token_w = jnp.sum(onehot, axis=1) * (1.0 / S)                  # (B, VOCAB)  XLU reduce

    # ---- MLP: (fused prefix + Linear1) -> ReLU -> Linear2 -> ReLU -> Linear3
    z = jnp.dot(token_w, wf_ref[...], preferred_element_type=jnp.float32)
    z = jnp.maximum(z + b1_ref[...], 0.0)                          # (B, HIDDEN_DIM)
    z = jnp.dot(z, w2_ref[...], preferred_element_type=jnp.float32)
    z = jnp.maximum(z + b2_ref[...], 0.0)                          # (B, HIDDEN_DIM)
    y = jnp.dot(z, w3_ref[...], preferred_element_type=jnp.float32) + b3_ref[...]

    # single contiguous store per row of the (B, OUT_DIM) output
    out_ref[...] = y


# ---------------- one-time parameter preparation (NOT on the forward path) ----
def prepare_params(params):
    """Merge the frozen LoRA adapter and fold the whole linear prefix
    (embedding -> merged q_proj -> mlp Linear1) into a single matrix.
    Exact for eval/inference (dropout identity, pooling commutes with the
    linear prefix).  Run once at parameter-load time."""
    w_eff = params["wq"] + LORA_SCALE * (params["lora_a"] @ params["lora_b"])
    w_fused = params["emb"].astype(jnp.float32) @ w_eff @ params["w1"]   # (VOCAB, HIDDEN_DIM)
    return {
        "w_fused": w_fused,
        "w2": params["w2"],
        "w3": params["w3"],
        "b1": params["b1"],
        "b2": params["b2"],
        "b3": params["b3"],
    }


# ---------------- forward: one pallas_call, no per-call weight prep ----------
@jax.jit
def lora_with_mlp_forward(input_ids, prep):
    B, S = input_ids.shape
    assert (B, S) == (BATCH, SEQ)
    # (B, S, 1): vocab lane axis broadcasts against the one-hot iota in-kernel.
    ids = input_ids.reshape(B, S, 1).astype(jnp.int32)

    # Single grid step (grid=()): all operands (~30 KiB) resident in VMEM,
    # no pipelining / double-buffering overhead, one output writeback.
    return pl.pallas_call(
        lora_mlp_kernel,
        out_shape=jax.ShapeDtypeStruct((B, OUT_DIM), jnp.float32),
        compiler_params=pltpu.CompilerParams(vmem_limit_bytes=4 * 1024 * 1024),
    )(ids, prep["w_fused"], prep["w2"], prep["w3"],
      prep["b1"], prep["b2"], prep["b3"])


# ---------------- deterministic parameter init --------------------------------
def init_params(key):
    ks = jax.random.split(key, 10)
    scale = 0.05
    return {
        "emb":    jax.random.normal(ks[0], (VOCAB, HIDDEN_SIZE), jnp.float32) * scale,
        "wq":     jax.random.normal(ks[1], (HIDDEN_SIZE, HIDDEN_SIZE), jnp.float32) * scale,
        "lora_a": jax.random.normal(ks[2], (HIDDEN_SIZE, LORA_R), jnp.float32) * scale,
        "lora_b": jax.random.normal(ks[3], (LORA_R, HIDDEN_SIZE), jnp.float32) * scale,
        "w1":     jax.random.normal(ks[4], (HIDDEN_SIZE, HIDDEN_DIM), jnp.float32) * scale,
        "b1":     jax.random.normal(ks[5], (1, HIDDEN_DIM), jnp.float32) * scale,
        "w2":     jax.random.normal(ks[6], (HIDDEN_DIM, HIDDEN_DIM), jnp.float32) * scale,
        "b2":     jax.random.normal(ks[7], (1, HIDDEN_DIM), jnp.float32) * scale,
        "w3":     jax.random.normal(ks[8], (HIDDEN_DIM, OUT_DIM), jnp.float32) * scale,
        "b3":     jax.random.normal(ks[9], (1, OUT_DIM), jnp.float32) * scale,
    }


# ---------------- pure-JAX reference (original, un-fused math) ----------------
def reference_forward(input_ids, p):
    x = p["emb"][input_ids].astype(jnp.float32)                    # (B, S, H)
    h = x @ p["wq"] + LORA_SCALE * ((x @ p["lora_a"]) @ p["lora_b"])
    pooled = h.mean(axis=1)                                        # (B, H)
    z = jax.nn.relu(pooled @ p["w1"] + p["b1"])
    z = jax.nn.relu(z @ p["w2"] + p["b2"])
    return z @ p["w3"] + p["b3"]


if __name__ == "__main__":
    key = jax.random.PRNGKey(0)
    k_ids, k_params = jax.random.split(key)
    params = init_params(k_params)

    # One-time weight preparation (would live next to checkpoint loading).
    prep = jax.tree_util.tree_map(jnp.asarray, prepare_params(params))
    prep = jax.tree_util.tree_map(jax.block_until_ready, prep)

    input_ids = jax.random.randint(k_ids, (BATCH, SEQ), 0, VOCAB, dtype=jnp.int32)

    out = lora_with_mlp_forward(input_ids, prep)
    out = jax.block_until_ready(out)

    ref = reference_forward(input_ids, params)
    assert out.shape == (BATCH, OUT_DIM)
    assert jnp.allclose(out, ref, atol=1e-5, rtol=1e-4), "mismatch vs reference"
    print("KERNEL_OK")
</pallas_src>

<mosaic_0001>
module attributes {stable_mosaic.version = 11 : i64} {
  func.func @lora_mlp_kernel(%arg0: memref<2x8x1xi32, #tpu.memory_space<vmem>>, %arg1: memref<64x32xf32, #tpu.memory_space<vmem>>, %arg2: memref<32x32xf32, #tpu.memory_space<vmem>>, %arg3: memref<32x24xf32, #tpu.memory_space<vmem>>, %arg4: memref<1x32xf32, #tpu.memory_space<vmem>>, %arg5: memref<1x32xf32, #tpu.memory_space<vmem>>, %arg6: memref<1x24xf32, #tpu.memory_space<vmem>>, %arg7: memref<2x24xf32, #tpu.memory_space<vmem>>) attributes {dimension_semantics = [], scalar_prefetch = 0 : i64, scratch_operands = 0 : i64, tpu.core_type = #tpu.core_type<tc>} {
    %c0 = arith.constant 0 : index
    %c0_0 = arith.constant 0 : index
    %c0_1 = arith.constant 0 : index
    %0 = vector.load %arg0[%c0, %c0_0, %c0_1] : memref<2x8x1xi32, #tpu.memory_space<vmem>>, vector<2x8x1xi32>
    %c0_i32 = arith.constant 0 : i32
    %c63_i32 = arith.constant 63 : i32
    %1 = vector.broadcast %c0_i32 : i32 to vector<2x8x1xi32>
    %2 = arith.maxsi %1, %0 : vector<2x8x1xi32>
    %3 = vector.broadcast %c63_i32 : i32 to vector<2x8x1xi32>
    %4 = arith.minsi %3, %2 : vector<2x8x1xi32>
    %5 = tpu.iota {dimensions = array<i32: 2>} : vector<2x8x64xi32>
    %6 = vector.broadcast %4 : vector<2x8x1xi32> to vector<2x8x64xi32>
    %7 = arith.cmpi eq, %6, %5 : vector<2x8x64xi32>
    %8 = arith.extui %7 : vector<2x8x64xi1> to vector<2x8x64xi32>
    %9 = arith.sitofp %8 : vector<2x8x64xi32> to vector<2x8x64xf32>
    %cst = arith.constant dense<0.000000e+00> : vector<2x64xf32>
    %10 = vector.multi_reduction <add>, %9, %cst [1] : vector<2x8x64xf32> to vector<2x64xf32>
    %cst_2 = arith.constant 1.250000e-01 : f32
    %11 = vector.broadcast %cst_2 : f32 to vector<2x64xf32>
    %12 = arith.mulf %10, %11 : vector<2x64xf32>
    %c0_3 = arith.constant 0 : index
    %c0_4 = arith.constant 0 : index
    %13 = vector.load %arg1[%c0_3, %c0_4] : memref<64x32xf32, #tpu.memory_space<vmem>>, vector<64x32xf32>
    %cst_5 = arith.constant dense<0.000000e+00> : vector<2x32xf32>
    %14 = tpu.matmul %12, %13, %cst_5 {dimension_numbers = #tpu.dot_dimension_numbers<[1], [0], [0], [1], [0, 0, 1, 1], [], []>} : vector<2x64xf32>, vector<64x32xf32>, vector<2x32xf32> -> vector<2x32xf32>
    %c0_6 = arith.constant 0 : index
    %c0_7 = arith.constant 0 : index
    %15 = vector.load %arg4[%c0_6, %c0_7] : memref<1x32xf32, #tpu.memory_space<vmem>>, vector<1x32xf32>
    %16 = vector.broadcast %15 : vector<1x32xf32> to vector<2x32xf32>
    %17 = arith.addf %14, %16 : vector<2x32xf32>
    %cst_8 = arith.constant 0.000000e+00 : f32
    %18 = vector.broadcast %cst_8 : f32 to vector<2x32xf32>
    %19 = arith.maximumf %17, %18 : vector<2x32xf32>
    %c0_9 = arith.constant 0 : index
    %c0_10 = arith.constant 0 : index
    %20 = vector.load %arg2[%c0_9, %c0_10] : memref<32x32xf32, #tpu.memory_space<vmem>>, vector<32x32xf32>
    %cst_11 = arith.constant dense<0.000000e+00> : vector<2x32xf32>
    %21 = tpu.matmul %19, %20, %cst_11 {dimension_numbers = #tpu.dot_dimension_numbers<[1], [0], [0], [1], [0, 0, 1, 1], [], []>} : vector<2x32xf32>, vector<32x32xf32>, vector<2x32xf32> -> vector<2x32xf32>
    %c0_12 = arith.constant 0 : index
    %c0_13 = arith.constant 0 : index
    %22 = vector.load %arg5[%c0_12, %c0_13] : memref<1x32xf32, #tpu.memory_space<vmem>>, vector<1x32xf32>
    %23 = vector.broadcast %22 : vector<1x32xf32> to vector<2x32xf32>
    %24 = arith.addf %21, %23 : vector<2x32xf32>
    %cst_14 = arith.constant 0.000000e+00 : f32
    %25 = vector.broadcast %cst_14 : f32 to vector<2x32xf32>
    %26 = arith.maximumf %24, %25 : vector<2x32xf32>
    %c0_15 = arith.constant 0 : index
    %c0_16 = arith.constant 0 : index
    %27 = vector.load %arg3[%c0_15, %c0_16] : memref<32x24xf32, #tpu.memory_space<vmem>>, vector<32x24xf32>
    %cst_17 = arith.constant dense<0.000000e+00> : vector<2x24xf32>
    %28 = tpu.matmul %26, %27, %cst_17 {dimension_numbers = #tpu.dot_dimension_numbers<[1], [0], [0], [1], [0, 0, 1, 1], [], []>} : vector<2x32xf32>, vector<32x24xf32>, vector<2x24xf32> -> vector<2x24xf32>
    %c0_18 = arith.constant 0 : index
    %c0_19 = arith.constant 0 : index
    %29 = vector.load %arg6[%c0_18, %c0_19] : memref<1x24xf32, #tpu.memory_space<vmem>>, vector<1x24xf32>
    %30 = vector.broadcast %29 : vector<1x24xf32> to vector<2x24xf32>
    %31 = arith.addf %28, %30 : vector<2x24xf32>
    %c0_20 = arith.constant 0 : index
    %c0_21 = arith.constant 0 : index
    %32 = vector.load %arg7[%c0_20, %c0_21] : memref<2x24xf32, #tpu.memory_space<vmem>>, vector<2x24xf32>
    tpu.vector_store %arg7[%c0_20, %c0_21], %31 {strides = array<i32>} : memref<2x24xf32, #tpu.memory_space<vmem>>, vector<2x24xf32>,
    return
  }
}

</mosaic_0001>

<llo_original>
// kernel: lora_with_mlp_forward.1
$region0: #{lora_with_mlp_forward.1}
  #allocation0 [shape = 'u32[]', space=smem, size = 0x4, offset = 0x4, fixed_abs, tag = 'smem constant byte address 0x4 - core index']
  #allocation1 [shape = 'u32[72,128]{1,0:T(1,128)}', space=vmem, size = 0x9000, scoped, tag = 'internal scratch']
  %s0 = inlined_call_operand.vmem [shape: s32[2,8,1], index: 0, kind: input, shape index: {}]
  %s1 = inlined_call_operand.vmem [shape: f32[64,32], index: 1, kind: input, shape index: {}]
  %s2 = inlined_call_operand.vmem [shape: f32[32,32], index: 2, kind: input, shape index: {}]
  %s3 = inlined_call_operand.vmem [shape: f32[32,24], index: 3, kind: input, shape index: {}]
  %s4 = inlined_call_operand.vmem [shape: f32[1,32], index: 4, kind: input, shape index: {}]
  %s5 = inlined_call_operand.vmem [shape: f32[1,32], index: 5, kind: input, shape index: {}]
  %s6 = inlined_call_operand.vmem [shape: f32[1,24], index: 6, kind: input, shape index: {}]
  %s7 = inlined_call_operand.hbm [shape: f32[2,24], index: 7, kind: output, shape index: {}]
  %s8 = sld [smem:[#allocation0]]
  $region38: #{lora_with_mlp_forward.1} parent=0
    _
  %s10 = ssub.s32 1, %s8
  %s11 = scalar_select 0, %s10, %s8
  $region1: #{lora_with_mlp_forward.1} parent=0
    #allocation2 [shape = 'u8[1024]{0}', space=vmem, size = 0x400, scoped, tag = 'output window, operand 0, single buffered']
    #allocation3 [shape = 's32[1]{0}', space=sflag, size = 0x4, scoped, tag = 'scoped memory for lora_with_mlp_forward.1']
    %12 = vsyncpa [#allocation3], 0
    // Predicated region
    $region2: #{lora_with_mlp_forward.1} parent=1 // pred_check
      _
    $region3: #{lora_with_mlp_forward.1} parent=1 // pred_check_branch
      %14 = sbr.rel (0) target = $region5
    $region4: #{lora_with_mlp_forward.1} parent=1 // pred_region
      _
    $region5: #{lora_with_mlp_forward.1} parent=1 // pred_fallthru
      _
    // Predicated region
    $region6: #{lora_with_mlp_forward.1} parent=1 // pred_check
      _
    $region7: #{lora_with_mlp_forward.1} parent=1 // pred_check_branch
      %16 = sbr.rel (0) target = $region9
    $region8: #{lora_with_mlp_forward.1} parent=1 // pred_region
      _
    $region9: #{lora_with_mlp_forward.1} parent=1 // pred_fallthru
      _
    // Predicated region
    $region10: #{lora_with_mlp_forward.1} parent=1 // pred_check
      _
    $region11: #{lora_with_mlp_forward.1} parent=1 // pred_check_branch
      %18 = sbr.rel (0) target = $region13
    $region12: #{lora_with_mlp_forward.1} parent=1 // pred_region
      _
    $region13: #{lora_with_mlp_forward.1} parent=1 // pred_fallthru
      _
    // Predicated region
    $region14: #{lora_with_mlp_forward.1} parent=1 // pred_check
      _
    $region15: #{lora_with_mlp_forward.1} parent=1 // pred_check_branch
      %20 = sbr.rel (0) target = $region17
    $region16: #{lora_with_mlp_forward.1} parent=1 // pred_region
      _
    $region17: #{lora_with_mlp_forward.1} parent=1 // pred_fallthru
      _
    // Predicated region
    $region18: #{lora_with_mlp_forward.1} parent=1 // pred_check
      _
    $region19: #{lora_with_mlp_forward.1} parent=1 // pred_check_branch
      %22 = sbr.rel (0) target = $region21
    $region20: #{lora_with_mlp_forward.1} parent=1 // pred_region
      _
    $region21: #{lora_with_mlp_forward.1} parent=1 // pred_fallthru
      _
    // Predicated region
    $region22: #{lora_with_mlp_forward.1} parent=1 // pred_check
      _
    $region23: #{lora_with_mlp_forward.1} parent=1 // pred_check_branch
      %24 = sbr.rel (0) target = $region25
    $region24: #{lora_with_mlp_forward.1} parent=1 // pred_region
      _
    $region25: #{lora_with_mlp_forward.1} parent=1 // pred_fallthru
      _
    // Predicated region
    $region26: #{lora_with_mlp_forward.1} parent=1 // pred_check
      _
    $region27: #{lora_with_mlp_forward.1} parent=1 // pred_check_branch
      %26 = sbr.rel (0) target = $region29
    $region28: #{lora_with_mlp_forward.1} parent=1 // pred_region
      _
    $region29: #{lora_with_mlp_forward.1} parent=1 // pred_fallthru
      _
    %v27 = vld [vmem:[%s0] sm:$0xff]
    %v28 = vld [vmem:[%s0 + $0x8] sm:$0xff]
    %vm29 = vcmp.gt.s32.totalorder %v27, 0
    %v30 = vsel %vm29, %v27, 0
    %vm31 = vcmp.gt.s32.totalorder %v28, 0
    %v32 = vsel %vm31, %v28, 0
    %vm33 = vcmp.lt.s32.totalorder %v30, 63
    %v34 = vsel %vm33, %v30, 63
    %vm35 = vcmp.lt.s32.totalorder %v32, 63
    %v36 = vsel %vm35, %v32, 63
    %v37 = vlaneseq
    %v38 = vand.u32 %v37, 127
    %39 = vset.pattern.permute.xlu0 0
    %40 = vperm.xlu0 %39, %v34
    %v41 = vpop.permute.xlu0 %40
    %42 = vset.pattern.permute.xlu0 0
    %43 = vperm.xlu0 %42, %v36
    %v44 = vpop.permute.xlu0 %43
    %vm45 = vcmp.eq.s32.totalorder %v41, %v38
    %vm46 = vcmp.eq.s32.totalorder %v44, %v38
    %v47 = vsel %vm45, 1, 0
    %v48 = vsel %vm46, 1, 0
    %v49 = vcvt.s32.f32 %v47
    %v50 = vcvt.s32.f32 %v48
    %vm51 = vcmask 523264
    %v52 = vsel %vm51, %v49, 0.0
    %v53 = vrot.slane %v52, 4
    %v54 = vadd.f32 %v52, %v53
    %v55 = vrot.slane %v54, 2
    %v56 = vadd.f32 %v54, %v55
    %v57 = vrot.slane %v56, 1
    %v58 = vadd.f32 %v56, %v57
    %v59 = vsel %vm51, %v50, 0.0
    %v60 = vrot.slane %v59, 4
    %v61 = vadd.f32 %v59, %v60
    %v62 = vrot.slane %v61, 2
    %v63 = vadd.f32 %v61, %v62
    %v64 = vrot.slane %v63, 1
    %v65 = vadd.f32 %v63, %v64
    %v66 = vmul.f32 %v58, 0.125
    %v67 = vmul.f32 %v65, 0.125
    %v68 = vld [vmem:[%s1] sm:$0xff]
    %v69 = vld [vmem:[%s1 + $0x8] sm:$0xff]
    %v70 = vld [vmem:[%s1 + $0x10] sm:$0xff]
    %v71 = vld [vmem:[%s1 + $0x18] sm:$0xff]
    %v72 = vld [vmem:[%s1 + $0x20] sm:$0xff]
    %v73 = vld [vmem:[%s1 + $0x28] sm:$0xff]
    %v74 = vld [vmem:[%s1 + $0x30] sm:$0xff]
    %v75 = vld [vmem:[%s1 + $0x38] sm:$0xff]
    %v76 = vld [vmem:[%s4] sm:$0x1]
    %v78 = vperm.slane %v76, 0
    %vm82 = vcmask 1041409
    %v83 = vsel %vm82, %v67, %v66
    %v84 = vsel %vm51, %v83, 0
    %86 = vmatpush.msra.mxu0 0.0
    %87 = vmatpush.msra.mxu0 0.0
    %88 = vmatpush.msra.mxu0 0.0
    %89 = vmatpush.msra.mxu0 0.0
    %90 = vmatpush.msra.mxu0 0.0
    %91 = vmatpush.msra.mxu0 0.0
    %92 = vmatpush.msra.mxu0 0.0
    %93 = vmatpush.msra.mxu0 0.0
    %94 = vmatpush.msra.mxu0 %v75
    %95 = vmatpush.msra.mxu0 %v74
    %96 = vmatpush.msra.mxu0 %v73
    %97 = vmatpush.msra.mxu0 %v72
    %98 = vmatpush.msra.mxu0 %v71
    %99 = vmatpush.msra.mxu0 %v70
    %100 = vmatpush.msra.mxu0 %v69
    %101 = vmatpush.msra.mxu0 %v68
    %102 = vmatmul.f32.gmra.mxu0 %v84
    %v103 = vpop.f32.mrf.mxu0
    %v104 = vadd.f32 %v78, %v103
    %105 = vdwg.mxu0
    %v106 = vmax.f32 %v104, 0.0
    %v107 = vld [vmem:[%s2] sm:$0xff]
    %v108 = vld [vmem:[%s2 + $0x8] sm:$0xff]
    %v109 = vld [vmem:[%s2 + $0x10] sm:$0xff]
    %v110 = vld [vmem:[%s2 + $0x18] sm:$0xff]
    %v111 = vld [vmem:[%s5] sm:$0x1]
    %v113 = vperm.slane %v111, 0
    %vm115 = vcmask 261120
    %v117 = vsel %vm115, %v106, 0
    %119 = vmatpush.msra.mxu0 0.0
    %120 = vmatpush.msra.mxu0 0.0
    %121 = vmatpush.msra.mxu0 0.0
    %122 = vmatpush.msra.mxu0 0.0
    %123 = vmatpush.msra.mxu0 0.0
    %124 = vmatpush.msra.mxu0 0.0
    %125 = vmatpush.msra.mxu0 0.0
    %126 = vmatpush.msra.mxu0 0.0
    %127 = vmatpush.msra.mxu0 0.0
    %128 = vmatpush.msra.mxu0 0.0
    %129 = vmatpush.msra.mxu0 0.0
    %130 = vmatpush.msra.mxu0 0.0
    %131 = vmatpush.msra.mxu0 %v110
    %132 = vmatpush.msra.mxu0 %v109
    %133 = vmatpush.msra.mxu0 %v108
    %134 = vmatpush.msra.mxu0 %v107
    %135 = vmatmul.f32.gmra.mxu0 %v117
    %v136 = vpop.f32.mrf.mxu0
    %v137 = vadd.f32 %v113, %v136
    %138 = vdwg.mxu0
    %v139 = vmax.f32 %v137, 0.0
    %v140 = vld [vmem:[%s3] sm:$0xff]
    %v141 = vld [vmem:[%s3 + $0x8] sm:$0xff]
    %v142 = vld [vmem:[%s3 + $0x10] sm:$0xff]
    %v143 = vld [vmem:[%s3 + $0x18] sm:$0xff]
    %v144 = vld [vmem:[%s6] sm:$0x1]
    %v146 = vperm.slane %v144, 0
    %v149 = vsel %vm115, %v139, 0
    %151 = vmatpush.msra.mxu0 0.0
    %152 = vmatpush.msra.mxu0 0.0
    %153 = vmatpush.msra.mxu0 0.0
    %154 = vmatpush.msra.mxu0 0.0
    %155 = vmatpush.msra.mxu0 0.0
    %156 = vmatpush.msra.mxu0 0.0
    %157 = vmatpush.msra.mxu0 0.0
    %158 = vmatpush.msra.mxu0 0.0
    %159 = vmatpush.msra.mxu0 0.0
    %160 = vmatpush.msra.mxu0 0.0
    %161 = vmatpush.msra.mxu0 0.0
    %162 = vmatpush.msra.mxu0 0.0
    %163 = vmatpush.msra.mxu0 %v143
    %164 = vmatpush.msra.mxu0 %v142
    %165 = vmatpush.msra.mxu0 %v141
    %166 = vmatpush.msra.mxu0 %v140
    %167 = vmatmul.f32.gmra.mxu0 %v149
    %v168 = vpop.f32.mrf.mxu0
    %v169 = vadd.f32 %v146, %v168
    %170 = vdwg.mxu0
    %vm171 = vcmask 189440
    %172 = vst.msk [vmem:[#allocation2] sm:$0x3] %vm171, %v169
    // Predicated region
    $region30: #{lora_with_mlp_forward.1} parent=1 // pred_check
      _
    $region31: #{lora_with_mlp_forward.1} parent=1 // pred_check_branch
      %174 = sbr.rel (0) target = $region33
    $region32: #{lora_with_mlp_forward.1} parent=1 // pred_region
      %176 = vsyncadd [#allocation3], 0
      %s178 = sshll.u32 [#allocation2], 4
      %s179 = int_to_ptr.vmem [resolvable:$true] %s178
      %s180 = sshll.u32 %s7, 4
      %s181 = int_to_ptr.hbm [resolvable:$true] %s180
      %183 = dma.vmem_to_hbm [thread:$0]  %s179, 32, %s181, [#allocation3]
    $region33: #{lora_with_mlp_forward.1} parent=1 // pred_fallthru
      _
    // Predicated region
    $region34: #{lora_with_mlp_forward.1} parent=1 // pred_check
      _
    $region35: #{lora_with_mlp_forward.1} parent=1 // pred_check_branch
      %185 = sbr.rel (0) target = $region37
    $region36: #{lora_with_mlp_forward.1} parent=1 // pred_region
      %187 = dma.done [#allocation3], 32
    $region37: #{lora_with_mlp_forward.1} parent=1 // pred_fallthru
      _
    %188 = vsyncpa [#allocation3], 1

</llo_original>
